<compile_context>
chip_gen: v5e
topology: v5e:2x2
jax: 0.10.0
libtpu: 0.0.40
codegen_flags: <defaults>
</compile_context>

<pallas_src>
import jax
import jax.numpy as jnp
from jax import lax
from jax.experimental import pallas as pl
from jax.experimental.pallas import tpu as pltpu

_BN_EPS = 1e-5


def _gru_kernel(fe_ref, qp_ref, wfe_ref, wq3_ref, bnw_ref, bnb_ref,
                wqkv_ref, bqkv_ref, out_ref):
    B, C, N = fe_ref.shape
    C8p = (wqkv_ref.shape[0] - C) // 2          # padded q/k output channels
    f32, bf16 = jnp.float32, jnp.bfloat16

    # ---- Stack the batch along the lane axis: (C, B*N), (3, B*N). -----------
    fe_all = jnp.concatenate([fe_ref[b] for b in range(B)], axis=1).astype(bf16)
    qp_all = jnp.concatenate([qp_ref[b] for b in range(B)], axis=1)     # f32

    # ---- Conv1d(k=1, no bias): F_E part on the MXU, Q' part (K=3) as three --
    # ---- broadcast FMAs on the VPU (saves an MXU round-trip, exact f32). ----
    x = jnp.dot(wfe_ref[...], fe_all, preferred_element_type=f32)       # (C, B*N) f32
    for i in range(3):
        x = x + wq3_ref[:, i:i + 1] * qp_all[i:i + 1, :]

    # ---- BatchNorm1d, training-mode forward: biased stats over (B, N). ------
    inv_count = 1.0 / float(B * N)
    mean = jnp.sum(x, axis=1, keepdims=True) * inv_count                # (C, 1)
    var = jnp.sum((x - mean) ** 2, axis=1, keepdims=True) * inv_count   # (C, 1)
    inv_std = lax.rsqrt(var + _BN_EPS)
    scale = bnw_ref[...] * inv_std                                      # (C, 1)
    shift = bnb_ref[...] - mean * scale                                 # (C, 1)
    x = jnp.maximum(x * scale + shift, 0.0)                             # (C, B*N) f32, post-ReLU
    x_bf = x.astype(bf16)

    # ---- Fused Q/K/V projection: one batch-stacked MXU matmul in NCW. -------
    # Row layout of wqkv/bqkv: [ q (C8p) | k (C8p) | gamma * v (C) ].
    qkv = jnp.dot(wqkv_ref[...], x_bf, preferred_element_type=f32) + bqkv_ref[...]
    q_all = qkv[:C8p]                                                   # (C8p, B*N) f32
    k_all = qkv[C8p:2 * C8p].astype(bf16)                               # (C8p, B*N) bf16
    v_all = qkv[2 * C8p:].astype(bf16)                                  # (C,   B*N) bf16 (gamma folded in)

    # ---- Per-batch self-attention (the only cross-position coupling). -------
    for b in range(B):                                                  # B small & static
        lo = b * N
        qbT = q_all[:, lo:lo + N].T.astype(bf16)                        # (N, C8p)  tiny transpose
        kb = k_all[:, lo:lo + N]                                        # (C8p, N)
        vb = v_all[:, lo:lo + N]                                        # (C, N)
        xb = x[:, lo:lo + N]                                            # (C, N)

        # energy[n, m] = <q_n, k_m>; zero-padded q/k rows contribute nothing.
        energy = jnp.dot(qbT, kb, preferred_element_type=f32)           # (N, N) f32
        e_max = jnp.max(energy, axis=-1, keepdims=True)
        p = jnp.exp(energy - e_max)
        denom = jnp.sum(p, axis=-1, keepdims=True)
        attn = (p * pl.reciprocal(denom, approx=True)).astype(bf16)     # softmax(dim=-1)

        # out[c, n] = sum_m v[c, m] * attn[n, m]; gamma already in v.
        outb = lax.dot_general(vb, attn, (((1,), (1,)), ((), ())),
                               preferred_element_type=f32)              # (C, N) lane-dense
        out_ref[b] = outb + xb


def global_refinement_unit(F_E, Q_prime, params):
    """F_E: (B, C, N), Q_prime: (B, 3, N)  ->  (B, C, N).  Native NCW layout."""
    B, C, N = F_E.shape
    assert C % 8 == 0, "C must be a multiple of 8 (sublane tiling / C//8 heads)"
    assert N % 128 == 0, "N must be a multiple of 128 (lane tiling)"
    C8 = C // 8
    C8p = ((C8 + 7) // 8) * 8                   # pad q/k rows to sublane tiles
    f32, bf16 = jnp.float32, jnp.bfloat16

    def _pad_rows(w, rows):
        if rows == w.shape[0]:
            return w
        pad = jnp.zeros((rows - w.shape[0],) + w.shape[1:], w.dtype)
        return jnp.concatenate([w, pad], axis=0)

    gamma = params['gamma'].reshape(()).astype(f32)
    # Fused QKV weights; gamma folded into the value rows so the kernel
    # epilogue is a plain add.
    wqkv = jnp.concatenate([
        _pad_rows(params['wq'], C8p),
        _pad_rows(params['wk'], C8p),
        gamma * params['wv'],
    ], axis=0).astype(bf16)                     # (2*C8p + C, C)
    bqkv = jnp.concatenate([
        _pad_rows(params['bq'].reshape(C8, 1), C8p),
        _pad_rows(params['bk'].reshape(C8, 1), C8p),
        gamma * params['bv'].reshape(C, 1),
    ], axis=0).astype(f32)                      # (2*C8p + C, 1)

    conv_w = params['conv_w']                   # (C, C+3)
    vmem_args = (
        F_E.astype(f32),                        # (B, C, N)
        Q_prime.astype(f32),                    # (B, 3, N)
        conv_w[:, :C].astype(bf16),             # (C, C)  conv weight, F_E part (MXU)
        conv_w[:, C:].astype(f32),              # (C, 3)  conv weight, Q'  part (VPU)
        params['bn_w'].reshape(C, 1).astype(f32),
        params['bn_b'].reshape(C, 1).astype(f32),
        wqkv,
        bqkv,
    )

    def _vmem_spec(a):
        nd = a.ndim
        return pl.BlockSpec(a.shape, lambda i, _nd=nd: (0,) * _nd)

    return pl.pallas_call(
        _gru_kernel,
        out_shape=jax.ShapeDtypeStruct((B, C, N), f32),
        grid=(1,),
        in_specs=[_vmem_spec(a) for a in vmem_args],
        out_specs=pl.BlockSpec((B, C, N), lambda i: (0, 0, 0)),
        compiler_params=pltpu.CompilerParams(
            dimension_semantics=("arbitrary",)),
    )(*vmem_args)


def init_params(key, C):
    """Deterministic synthetic params matching the module's __init__ shapes."""
    C8 = C // 8
    ks = jax.random.split(key, 9)
    p = {
        'conv_w': 0.1 * jax.random.normal(ks[0], (C, C + 3), jnp.float32),  # Conv1d(C+3->C, k=1, no bias)
        'bn_w':   1.0 + 0.1 * jax.random.normal(ks[1], (C,), jnp.float32),  # BatchNorm1d weight
        'bn_b':   0.1 * jax.random.normal(ks[2], (C,), jnp.float32),        # BatchNorm1d bias
        'wq':     0.1 * jax.random.normal(ks[3], (C8, C), jnp.float32),     # query_conv weight (k=1)
        'bq':     0.1 * jax.random.normal(ks[4], (C8,), jnp.float32),
        'wk':     0.1 * jax.random.normal(ks[5], (C8, C), jnp.float32),     # key_conv weight
        'bk':     0.1 * jax.random.normal(ks[6], (C8,), jnp.float32),
        'wv':     0.1 * jax.random.normal(ks[7], (C, C), jnp.float32),      # value_conv weight
        'bv':     0.1 * jax.random.normal(ks[8], (C,), jnp.float32),
        # torch inits gamma to 0; use a nonzero value so the attention path is
        # exercised (do NOT use for parity tests against a fresh torch module).
        'gamma':  jnp.array([0.5], jnp.float32),
    }
    return p


def _reference_forward(F_E, Q_prime, p):
    """Pure-JAX mirror of the PyTorch forward (NCW layout, f32 throughout)."""
    combined = jnp.concatenate([F_E, Q_prime], axis=1)                  # (B, C+3, N)
    x = jnp.einsum('ck,bkn->bcn', p['conv_w'], combined)
    mean = jnp.mean(x, axis=(0, 2), keepdims=True)
    var = jnp.mean((x - mean) ** 2, axis=(0, 2), keepdims=True)
    x = (x - mean) / jnp.sqrt(var + _BN_EPS)
    x = x * p['bn_w'][None, :, None] + p['bn_b'][None, :, None]
    x = jnp.maximum(x, 0.0)
    q = jnp.einsum('oc,bcn->bon', p['wq'], x) + p['bq'][None, :, None]
    k = jnp.einsum('oc,bcn->bon', p['wk'], x) + p['bk'][None, :, None]
    v = jnp.einsum('oc,bcn->bon', p['wv'], x) + p['bv'][None, :, None]
    energy = jnp.einsum('bon,bom->bnm', q, k)
    attn = jax.nn.softmax(energy, axis=-1)
    out = jnp.einsum('bcm,bnm->bcn', v, attn)
    return p['gamma'][0] * out + x


if __name__ == "__main__":
    B, C, N = 2, 32, 128                     # rN = 128 points, C = 32 channels
    key = jax.random.PRNGKey(0)
    k_fe, k_qp, k_par = jax.random.split(key, 3)

    F_E = jax.random.normal(k_fe, (B, C, N), jnp.float32)
    Q_prime = jax.random.normal(k_qp, (B, 3, N), jnp.float32)
    params = init_params(k_par, C)

    out = global_refinement_unit(F_E, Q_prime, params)
    out = jax.block_until_ready(out)
    assert out.shape == (B, C, N)

    ref = jax.block_until_ready(_reference_forward(F_E, Q_prime, params))
    # Tolerance accounts for bf16 MXU inputs (f32 accumulation) in the kernel.
    assert jnp.allclose(out, ref, atol=2e-2, rtol=2e-2), float(jnp.max(jnp.abs(out - ref)))

    print("KERNEL_OK")
</pallas_src>

<mosaic_0001>
module attributes {stable_mosaic.version = 11 : i64} {
  func.func @_gru_kernel(%arg0: i32, %arg1: memref<2x32x128xf32, #tpu.memory_space<vmem>>, %arg2: memref<2x3x128xf32, #tpu.memory_space<vmem>>, %arg3: memref<32x32xbf16, #tpu.memory_space<vmem>>, %arg4: memref<32x3xf32, #tpu.memory_space<vmem>>, %arg5: memref<32x1xf32, #tpu.memory_space<vmem>>, %arg6: memref<32x1xf32, #tpu.memory_space<vmem>>, %arg7: memref<48x32xbf16, #tpu.memory_space<vmem>>, %arg8: memref<48x1xf32, #tpu.memory_space<vmem>>, %arg9: memref<2x32x128xf32, #tpu.memory_space<vmem>>) attributes {dimension_semantics = [#tpu.dimension_semantics<arbitrary>], iteration_bounds = array<i64: 1>, scalar_prefetch = 0 : i64, scratch_operands = 0 : i64, tpu.core_type = #tpu.core_type<tc>, window_params = [{pipeline_mode = #tpu.pipeline_mode<synchronous>, transform_indices = @transform_0, window_bounds = array<i64: 2, 32, 128>}, {pipeline_mode = #tpu.pipeline_mode<synchronous>, transform_indices = @transform_1, window_bounds = array<i64: 2, 3, 128>}, {pipeline_mode = #tpu.pipeline_mode<synchronous>, transform_indices = @transform_2, window_bounds = array<i64: 32, 32>}, {pipeline_mode = #tpu.pipeline_mode<synchronous>, transform_indices = @transform_3, window_bounds = array<i64: 32, 3>}, {pipeline_mode = #tpu.pipeline_mode<synchronous>, transform_indices = @transform_4, window_bounds = array<i64: 32, 1>}, {pipeline_mode = #tpu.pipeline_mode<synchronous>, transform_indices = @transform_5, window_bounds = array<i64: 32, 1>}, {pipeline_mode = #tpu.pipeline_mode<synchronous>, transform_indices = @transform_6, window_bounds = array<i64: 48, 32>}, {pipeline_mode = #tpu.pipeline_mode<synchronous>, transform_indices = @transform_7, window_bounds = array<i64: 48, 1>}, {pipeline_mode = #tpu.pipeline_mode<synchronous>, transform_indices = @transform_8, window_bounds = array<i64: 2, 32, 128>}]} {
    %c0 = arith.constant 0 : index
    %c0_0 = arith.constant 0 : index
    %c0_1 = arith.constant 0 : index
    %0 = vector.load %arg1[%c0, %c0_0, %c0_1] : memref<2x32x128xf32, #tpu.memory_space<vmem>>, vector<1x32x128xf32>
    %1 = vector.shape_cast %0 : vector<1x32x128xf32> to vector<32x128xf32>
    %c1 = arith.constant 1 : index
    %c0_2 = arith.constant 0 : index
    %c0_3 = arith.constant 0 : index
    %2 = vector.load %arg1[%c1, %c0_2, %c0_3] : memref<2x32x128xf32, #tpu.memory_space<vmem>>, vector<1x32x128xf32>
    %3 = vector.shape_cast %2 : vector<1x32x128xf32> to vector<32x128xf32>
    %4 = tpu.concatenate %1, %3 in 1 : vector<32x128xf32>, vector<32x128xf32> -> vector<32x256xf32>
    %5 = arith.truncf %4 : vector<32x256xf32> to vector<32x256xbf16>
    %c0_4 = arith.constant 0 : index
    %c0_5 = arith.constant 0 : index
    %c0_6 = arith.constant 0 : index
    %6 = vector.load %arg2[%c0_4, %c0_5, %c0_6] : memref<2x3x128xf32, #tpu.memory_space<vmem>>, vector<1x3x128xf32>
    %7 = vector.shape_cast %6 : vector<1x3x128xf32> to vector<3x128xf32>
    %c1_7 = arith.constant 1 : index
    %c0_8 = arith.constant 0 : index
    %c0_9 = arith.constant 0 : index
    %8 = vector.load %arg2[%c1_7, %c0_8, %c0_9] : memref<2x3x128xf32, #tpu.memory_space<vmem>>, vector<1x3x128xf32>
    %9 = vector.shape_cast %8 : vector<1x3x128xf32> to vector<3x128xf32>
    %10 = tpu.concatenate %7, %9 in 1 : vector<3x128xf32>, vector<3x128xf32> -> vector<3x256xf32>
    %c0_10 = arith.constant 0 : index
    %c0_11 = arith.constant 0 : index
    %11 = vector.load %arg3[%c0_10, %c0_11] : memref<32x32xbf16, #tpu.memory_space<vmem>>, vector<32x32xbf16>
    %cst = arith.constant dense<0.000000e+00> : vector<32x256xf32>
    %12 = tpu.matmul %11, %5, %cst {dimension_numbers = #tpu.dot_dimension_numbers<[1], [0], [0], [1], [0, 0, 1, 1], [], []>} : vector<32x32xbf16>, vector<32x256xbf16>, vector<32x256xf32> -> vector<32x256xf32>
    %c0_12 = arith.constant 0 : index
    %c0_13 = arith.constant 0 : index
    %13 = vector.load %arg4[%c0_12, %c0_13] : memref<32x3xf32, #tpu.memory_space<vmem>>, vector<32x1xf32>
    %14 = vector.extract_strided_slice %10 {offsets = [0, 0], sizes = [1, 256], strides = [1, 1]} : vector<3x256xf32> to vector<1x256xf32>
    %15 = vector.broadcast %13 : vector<32x1xf32> to vector<32x256xf32>
    %16 = vector.broadcast %14 : vector<1x256xf32> to vector<32x256xf32>
    %17 = arith.mulf %15, %16 : vector<32x256xf32>
    %18 = arith.addf %12, %17 : vector<32x256xf32>
    %c0_14 = arith.constant 0 : index
    %c1_15 = arith.constant 1 : index
    %19 = vector.load %arg4[%c0_14, %c1_15] : memref<32x3xf32, #tpu.memory_space<vmem>>, vector<32x1xf32>
    %20 = vector.extract_strided_slice %10 {offsets = [1, 0], sizes = [1, 256], strides = [1, 1]} : vector<3x256xf32> to vector<1x256xf32>
    %21 = vector.broadcast %19 : vector<32x1xf32> to vector<32x256xf32>
    %22 = vector.broadcast %20 : vector<1x256xf32> to vector<32x256xf32>
    %23 = arith.mulf %21, %22 : vector<32x256xf32>
    %24 = arith.addf %18, %23 : vector<32x256xf32>
    %c0_16 = arith.constant 0 : index
    %c2 = arith.constant 2 : index
    %25 = vector.load %arg4[%c0_16, %c2] : memref<32x3xf32, #tpu.memory_space<vmem>>, vector<32x1xf32>
    %26 = vector.extract_strided_slice %10 {offsets = [2, 0], sizes = [1, 256], strides = [1, 1]} : vector<3x256xf32> to vector<1x256xf32>
    %27 = vector.broadcast %25 : vector<32x1xf32> to vector<32x256xf32>
    %28 = vector.broadcast %26 : vector<1x256xf32> to vector<32x256xf32>
    %29 = arith.mulf %27, %28 : vector<32x256xf32>
    %30 = arith.addf %24, %29 : vector<32x256xf32>
    %cst_17 = arith.constant dense<0.000000e+00> : vector<32xf32>
    %31 = vector.multi_reduction <add>, %30, %cst_17 [1] : vector<32x256xf32> to vector<32xf32>
    %32 = vector.shape_cast %31 : vector<32xf32> to vector<32x1xf32>
    %cst_18 = arith.constant 3.906250e-03 : f32
    %33 = vector.broadcast %cst_18 : f32 to vector<32x1xf32>
    %34 = arith.mulf %32, %33 : vector<32x1xf32>
    %35 = vector.broadcast %34 : vector<32x1xf32> to vector<32x256xf32>
    %36 = arith.subf %30, %35 : vector<32x256xf32>
    %37 = arith.mulf %36, %36 : vector<32x256xf32>
    %cst_19 = arith.constant dense<0.000000e+00> : vector<32xf32>
    %38 = vector.multi_reduction <add>, %37, %cst_19 [1] : vector<32x256xf32> to vector<32xf32>
    %39 = vector.shape_cast %38 : vector<32xf32> to vector<32x1xf32>
    %cst_20 = arith.constant 3.906250e-03 : f32
    %40 = vector.broadcast %cst_20 : f32 to vector<32x1xf32>
    %41 = arith.mulf %39, %40 : vector<32x1xf32>
    %cst_21 = arith.constant 9.99999974E-6 : f32
    %42 = vector.broadcast %cst_21 : f32 to vector<32x1xf32>
    %43 = arith.addf %41, %42 : vector<32x1xf32>
    %44 = math.rsqrt %43 : vector<32x1xf32>
    %c0_22 = arith.constant 0 : index
    %c0_23 = arith.constant 0 : index
    %45 = vector.load %arg5[%c0_22, %c0_23] : memref<32x1xf32, #tpu.memory_space<vmem>>, vector<32x1xf32>
    %46 = arith.mulf %45, %44 : vector<32x1xf32>
    %c0_24 = arith.constant 0 : index
    %c0_25 = arith.constant 0 : index
    %47 = vector.load %arg6[%c0_24, %c0_25] : memref<32x1xf32, #tpu.memory_space<vmem>>, vector<32x1xf32>
    %48 = arith.mulf %34, %46 : vector<32x1xf32>
    %49 = arith.subf %47, %48 : vector<32x1xf32>
    %50 = vector.broadcast %46 : vector<32x1xf32> to vector<32x256xf32>
    %51 = arith.mulf %30, %50 : vector<32x256xf32>
    %52 = vector.broadcast %49 : vector<32x1xf32> to vector<32x256xf32>
    %53 = arith.addf %51, %52 : vector<32x256xf32>
    %cst_26 = arith.constant 0.000000e+00 : f32
    %54 = vector.broadcast %cst_26 : f32 to vector<32x256xf32>
    %55 = arith.maximumf %53, %54 : vector<32x256xf32>
    %56 = arith.truncf %55 : vector<32x256xf32> to vector<32x256xbf16>
    %c0_27 = arith.constant 0 : index
    %c0_28 = arith.constant 0 : index
    %57 = vector.load %arg7[%c0_27, %c0_28] : memref<48x32xbf16, #tpu.memory_space<vmem>>, vector<48x32xbf16>
    %cst_29 = arith.constant dense<0.000000e+00> : vector<48x256xf32>
    %58 = tpu.matmul %57, %56, %cst_29 {dimension_numbers = #tpu.dot_dimension_numbers<[1], [0], [0], [1], [0, 0, 1, 1], [], []>} : vector<48x32xbf16>, vector<32x256xbf16>, vector<48x256xf32> -> vector<48x256xf32>
    %c0_30 = arith.constant 0 : index
    %c0_31 = arith.constant 0 : index
    %59 = vector.load %arg8[%c0_30, %c0_31] : memref<48x1xf32, #tpu.memory_space<vmem>>, vector<48x1xf32>
    %60 = vector.broadcast %59 : vector<48x1xf32> to vector<48x256xf32>
    %61 = arith.addf %58, %60 : vector<48x256xf32>
    %62 = vector.extract_strided_slice %61 {offsets = [0, 0], sizes = [8, 256], strides = [1, 1]} : vector<48x256xf32> to vector<8x256xf32>
    %63 = vector.extract_strided_slice %61 {offsets = [8, 0], sizes = [8, 256], strides = [1, 1]} : vector<48x256xf32> to vector<8x256xf32>
    %64 = arith.truncf %63 : vector<8x256xf32> to vector<8x256xbf16>
    %65 = vector.extract_strided_slice %61 {offsets = [16, 0], sizes = [32, 256], strides = [1, 1]} : vector<48x256xf32> to vector<32x256xf32>
    %66 = arith.truncf %65 : vector<32x256xf32> to vector<32x256xbf16>
    %67 = vector.extract_strided_slice %62 {offsets = [0, 0], sizes = [8, 128], strides = [1, 1]} : vector<8x256xf32> to vector<8x128xf32>
    %68 = tpu.transpose %67, [1, 0] : vector<8x128xf32> -> vector<128x8xf32>
    %69 = arith.truncf %68 : vector<128x8xf32> to vector<128x8xbf16>
    %70 = vector.extract_strided_slice %64 {offsets = [0, 0], sizes = [8, 128], strides = [1, 1]} : vector<8x256xbf16> to vector<8x128xbf16>
    %71 = vector.extract_strided_slice %66 {offsets = [0, 0], sizes = [32, 128], strides = [1, 1]} : vector<32x256xbf16> to vector<32x128xbf16>
    %72 = vector.extract_strided_slice %55 {offsets = [0, 0], sizes = [32, 128], strides = [1, 1]} : vector<32x256xf32> to vector<32x128xf32>
    %cst_32 = arith.constant dense<0.000000e+00> : vector<128x128xf32>
    %73 = tpu.matmul %69, %70, %cst_32 {dimension_numbers = #tpu.dot_dimension_numbers<[1], [0], [0], [1], [0, 0, 1, 1], [], []>} : vector<128x8xbf16>, vector<8x128xbf16>, vector<128x128xf32> -> vector<128x128xf32>
    %cst_33 = arith.constant dense<0xFF800000> : vector<128xf32>
    %74 = vector.multi_reduction <maximumf>, %73, %cst_33 [1] : vector<128x128xf32> to vector<128xf32>
    %75 = vector.shape_cast %74 : vector<128xf32> to vector<128x1xf32>
    %76 = vector.broadcast %75 : vector<128x1xf32> to vector<128x128xf32>
    %77 = arith.subf %73, %76 : vector<128x128xf32>
    %78 = math.exp %77 : vector<128x128xf32>
    %cst_34 = arith.constant dense<0.000000e+00> : vector<128xf32>
    %79 = vector.multi_reduction <add>, %78, %cst_34 [1] : vector<128x128xf32> to vector<128xf32>
    %80 = vector.shape_cast %79 : vector<128xf32> to vector<128x1xf32>
    %81 = tpu.reciprocal %80 {approx = true} : vector<128x1xf32> -> vector<128x1xf32>
    %82 = vector.broadcast %81 : vector<128x1xf32> to vector<128x128xf32>
    %83 = arith.mulf %78, %82 : vector<128x128xf32>
    %84 = arith.truncf %83 : vector<128x128xf32> to vector<128x128xbf16>
    %cst_35 = arith.constant dense<0.000000e+00> : vector<32x128xf32>
    %85 = tpu.matmul %71, %84, %cst_35 {dimension_numbers = #tpu.dot_dimension_numbers<[1], [1], [0], [0], [0, 0, 1, 0], [], []>} : vector<32x128xbf16>, vector<128x128xbf16>, vector<32x128xf32> -> vector<32x128xf32>
    %86 = arith.addf %85, %72 : vector<32x128xf32>
    %c0_36 = arith.constant 0 : index
    %c0_37 = arith.constant 0 : index
    %c0_38 = arith.constant 0 : index
    %87 = vector.load %arg9[%c0_36, %c0_37, %c0_38] : memref<2x32x128xf32, #tpu.memory_space<vmem>>, vector<1x32x128xf32>
    %88 = vector.shape_cast %87 : vector<1x32x128xf32> to vector<32x128xf32>
    %89 = vector.shape_cast %86 : vector<32x128xf32> to vector<1x32x128xf32>
    tpu.vector_store %arg9[%c0_36, %c0_37, %c0_38], %89 {strides = array<i32>} : memref<2x32x128xf32, #tpu.memory_space<vmem>>, vector<1x32x128xf32>,
    %90 = vector.extract_strided_slice %62 {offsets = [0, 128], sizes = [8, 128], strides = [1, 1]} : vector<8x256xf32> to vector<8x128xf32>
    %91 = tpu.transpose %90, [1, 0] : vector<8x128xf32> -> vector<128x8xf32>
    %92 = arith.truncf %91 : vector<128x8xf32> to vector<128x8xbf16>
    %93 = vector.extract_strided_slice %64 {offsets = [0, 128], sizes = [8, 128], strides = [1, 1]} : vector<8x256xbf16> to vector<8x128xbf16>
    %94 = vector.extract_strided_slice %66 {offsets = [0, 128], sizes = [32, 128], strides = [1, 1]} : vector<32x256xbf16> to vector<32x128xbf16>
    %95 = vector.extract_strided_slice %55 {offsets = [0, 128], sizes = [32, 128], strides = [1, 1]} : vector<32x256xf32> to vector<32x128xf32>
    %cst_39 = arith.constant dense<0.000000e+00> : vector<128x128xf32>
    %96 = tpu.matmul %92, %93, %cst_39 {dimension_numbers = #tpu.dot_dimension_numbers<[1], [0], [0], [1], [0, 0, 1, 1], [], []>} : vector<128x8xbf16>, vector<8x128xbf16>, vector<128x128xf32> -> vector<128x128xf32>
    %cst_40 = arith.constant dense<0xFF800000> : vector<128xf32>
    %97 = vector.multi_reduction <maximumf>, %96, %cst_40 [1] : vector<128x128xf32> to vector<128xf32>
    %98 = vector.shape_cast %97 : vector<128xf32> to vector<128x1xf32>
    %99 = vector.broadcast %98 : vector<128x1xf32> to vector<128x128xf32>
    %100 = arith.subf %96, %99 : vector<128x128xf32>
    %101 = math.exp %100 : vector<128x128xf32>
    %cst_41 = arith.constant dense<0.000000e+00> : vector<128xf32>
    %102 = vector.multi_reduction <add>, %101, %cst_41 [1] : vector<128x128xf32> to vector<128xf32>
    %103 = vector.shape_cast %102 : vector<128xf32> to vector<128x1xf32>
    %104 = tpu.reciprocal %103 {approx = true} : vector<128x1xf32> -> vector<128x1xf32>
    %105 = vector.broadcast %104 : vector<128x1xf32> to vector<128x128xf32>
    %106 = arith.mulf %101, %105 : vector<128x128xf32>
    %107 = arith.truncf %106 : vector<128x128xf32> to vector<128x128xbf16>
    %cst_42 = arith.constant dense<0.000000e+00> : vector<32x128xf32>
    %108 = tpu.matmul %94, %107, %cst_42 {dimension_numbers = #tpu.dot_dimension_numbers<[1], [1], [0], [0], [0, 0, 1, 0], [], []>} : vector<32x128xbf16>, vector<128x128xbf16>, vector<32x128xf32> -> vector<32x128xf32>
    %109 = arith.addf %108, %95 : vector<32x128xf32>
    %c1_43 = arith.constant 1 : index
    %c0_44 = arith.constant 0 : index
    %c0_45 = arith.constant 0 : index
    %110 = vector.load %arg9[%c1_43, %c0_44, %c0_45] : memref<2x32x128xf32, #tpu.memory_space<vmem>>, vector<1x32x128xf32>
    %111 = vector.shape_cast %110 : vector<1x32x128xf32> to vector<32x128xf32>
    %112 = vector.shape_cast %109 : vector<32x128xf32> to vector<1x32x128xf32>
    tpu.vector_store %arg9[%c1_43, %c0_44, %c0_45], %112 {strides = array<i32>} : memref<2x32x128xf32, #tpu.memory_space<vmem>>, vector<1x32x128xf32>,
    return
  }
  func.func @transform_0(%arg0: i32) -> (i32, i32, i32) {
    %c0_i32 = arith.constant 0 : i32
    %c0_i32_0 = arith.constant 0 : i32
    %c0_i32_1 = arith.constant 0 : i32
    %c0_i32_2 = arith.constant 0 : i32
    return %c0_i32, %c0_i32_0, %c0_i32_1 : i32, i32, i32
  }
  func.func @transform_1(%arg0: i32) -> (i32, i32, i32) {
    %c0_i32 = arith.constant 0 : i32
    %c0_i32_0 = arith.constant 0 : i32
    %c0_i32_1 = arith.constant 0 : i32
    %c0_i32_2 = arith.constant 0 : i32
    return %c0_i32, %c0_i32_0, %c0_i32_1 : i32, i32, i32
  }
  func.func @transform_2(%arg0: i32) -> (i32, i32) {
    %c0_i32 = arith.constant 0 : i32
    %c0_i32_0 = arith.constant 0 : i32
    %c0_i32_1 = arith.constant 0 : i32
    return %c0_i32, %c0_i32_0 : i32, i32
  }
  func.func @transform_3(%arg0: i32) -> (i32, i32) {
    %c0_i32 = arith.constant 0 : i32
    %c0_i32_0 = arith.constant 0 : i32
    %c0_i32_1 = arith.constant 0 : i32
    return %c0_i32, %c0_i32_0 : i32, i32
  }
  func.func @transform_4(%arg0: i32) -> (i32, i32) {
    %c0_i32 = arith.constant 0 : i32
    %c0_i32_0 = arith.constant 0 : i32
    %c0_i32_1 = arith.constant 0 : i32
    return %c0_i32, %c0_i32_0 : i32, i32
  }
  func.func @transform_5(%arg0: i32) -> (i32, i32) {
    %c0_i32 = arith.constant 0 : i32
    %c0_i32_0 = arith.constant 0 : i32
    %c0_i32_1 = arith.constant 0 : i32
    return %c0_i32, %c0_i32_0 : i32, i32
  }
  func.func @transform_6(%arg0: i32) -> (i32, i32) {
    %c0_i32 = arith.constant 0 : i32
    %c0_i32_0 = arith.constant 0 : i32
    %c0_i32_1 = arith.constant 0 : i32
    return %c0_i32, %c0_i32_0 : i32, i32
  }
  func.func @transform_7(%arg0: i32) -> (i32, i32) {
    %c0_i32 = arith.constant 0 : i32
    %c0_i32_0 = arith.constant 0 : i32
    %c0_i32_1 = arith.constant 0 : i32
    return %c0_i32, %c0_i32_0 : i32, i32
  }
  func.func @transform_8(%arg0: i32) -> (i32, i32, i32) {
    %c0_i32 = arith.constant 0 : i32
    %c0_i32_0 = arith.constant 0 : i32
    %c0_i32_1 = arith.constant 0 : i32
    %c0_i32_2 = arith.constant 0 : i32
    return %c0_i32, %c0_i32_0, %c0_i32_1 : i32, i32, i32
  }
}

</mosaic_0001>

<llo_original>
// kernel: tpu_custom_call.1
$region0: #{tpu_custom_call.1}
  #allocation0 [shape = 'u32[]', space=smem, size = 0x4, offset = 0x4, fixed_abs, tag = 'smem constant byte address 0x4 - core index']
  #allocation1 [shape = 'u32[72,128]{1,0:T(1,128)}', space=vmem, size = 0x9000, scoped, tag = 'internal scratch']
  %s0 = inlined_call_operand.vmem [shape: f32[2,32,128], index: 0, kind: input, shape index: {}]
  %s1 = inlined_call_operand.vmem [shape: f32[2,3,128], index: 1, kind: input, shape index: {}]
  %s2 = inlined_call_operand.vmem [shape: bf16[32,32], index: 2, kind: input, shape index: {}]
  %s3 = inlined_call_operand.vmem [shape: f32[32,3], index: 3, kind: input, shape index: {}]
  %s4 = inlined_call_operand.vmem [shape: f32[32,1], index: 4, kind: input, shape index: {}]
  %s5 = inlined_call_operand.vmem [shape: f32[32,1], index: 5, kind: input, shape index: {}]
  %s6 = inlined_call_operand.vmem [shape: bf16[48,32], index: 6, kind: input, shape index: {}]
  %s7 = inlined_call_operand.vmem [shape: f32[48,1], index: 7, kind: input, shape index: {}]
  %s8 = inlined_call_operand.hbm [shape: f32[2,32,128], index: 8, kind: output, shape index: {}]
  %s9 = sld [smem:[#allocation0]]
  $region42: #{tpu_custom_call.1} parent=0
    _
  %s11 = ssub.s32 1, %s9
  %s12 = scalar_select 0, %s11, %s9
  $region1: #{tpu_custom_call.1} parent=0
    #allocation2 [shape = 'u8[32768]{0}', space=vmem, size = 0x8000, scoped, tag = 'output window, operand 0, single buffered']
    #allocation3 [shape = 's32[1]{0}', space=sflag, size = 0x4, scoped, tag = 'scoped memory for tpu_custom_call.1']
    %13 = vsyncpa [#allocation3], 0
    // Predicated region
    $region2: #{tpu_custom_call.1} parent=1 // pred_check
      _
    $region3: #{tpu_custom_call.1} parent=1 // pred_check_branch
      %15 = sbr.rel (0) target = $region5
    $region4: #{tpu_custom_call.1} parent=1 // pred_region
      _
    $region5: #{tpu_custom_call.1} parent=1 // pred_fallthru
      _
    // Predicated region
    $region6: #{tpu_custom_call.1} parent=1 // pred_check
      _
    $region7: #{tpu_custom_call.1} parent=1 // pred_check_branch
      %17 = sbr.rel (0) target = $region9
    $region8: #{tpu_custom_call.1} parent=1 // pred_region
      _
    $region9: #{tpu_custom_call.1} parent=1 // pred_fallthru
      _
    // Predicated region
    $region10: #{tpu_custom_call.1} parent=1 // pred_check
      _
    $region11: #{tpu_custom_call.1} parent=1 // pred_check_branch
      %19 = sbr.rel (0) target = $region13
    $region12: #{tpu_custom_call.1} parent=1 // pred_region
      _
    $region13: #{tpu_custom_call.1} parent=1 // pred_fallthru
      _
    // Predicated region
    $region14: #{tpu_custom_call.1} parent=1 // pred_check
      _
    $region15: #{tpu_custom_call.1} parent=1 // pred_check_branch
      %21 = sbr.rel (0) target = $region17
    $region16: #{tpu_custom_call.1} parent=1 // pred_region
      _
    $region17: #{tpu_custom_call.1} parent=1 // pred_fallthru
      _
    // Predicated region
    $region18: #{tpu_custom_call.1} parent=1 // pred_check
      _
    $region19: #{tpu_custom_call.1} parent=1 // pred_check_branch
      %23 = sbr.rel (0) target = $region21
    $region20: #{tpu_custom_call.1} parent=1 // pred_region
      _
    $region21: #{tpu_custom_call.1} parent=1 // pred_fallthru
      _
    // Predicated region
    $region22: #{tpu_custom_call.1} parent=1 // pred_check
      _
    $region23: #{tpu_custom_call.1} parent=1 // pred_check_branch
      %25 = sbr.rel (0) target = $region25
    $region24: #{tpu_custom_call.1} parent=1 // pred_region
      _
    $region25: #{tpu_custom_call.1} parent=1 // pred_fallthru
      _
    // Predicated region
    $region26: #{tpu_custom_call.1} parent=1 // pred_check
      _
    $region27: #{tpu_custom_call.1} parent=1 // pred_check_branch
      %27 = sbr.rel (0) target = $region29
    $region28: #{tpu_custom_call.1} parent=1 // pred_region
      _
    $region29: #{tpu_custom_call.1} parent=1 // pred_fallthru
      _
    // Predicated region
    $region30: #{tpu_custom_call.1} parent=1 // pred_check
      _
    $region31: #{tpu_custom_call.1} parent=1 // pred_check_branch
      %29 = sbr.rel (0) target = $region33
    $region32: #{tpu_custom_call.1} parent=1 // pred_region
      _
    $region33: #{tpu_custom_call.1} parent=1 // pred_fallthru
      _
    %v31 = vld [vmem:[%s0] sm:$0xff]
    %v32 = vld [vmem:[%s0 + $0x8] sm:$0xff]
    %v33 = vld [vmem:[%s0 + $0x10] sm:$0xff]
    %v34 = vld [vmem:[%s0 + $0x18] sm:$0xff]
    %s35 = scalar_lea.vmem %s0, 32
    %v36 = vld [vmem:[%s35] sm:$0xff]
    %v37 = vld [vmem:[%s35 + $0x8] sm:$0xff]
    %v38 = vld [vmem:[%s35 + $0x10] sm:$0xff]
    %v39 = vld [vmem:[%s35 + $0x18] sm:$0xff]
    %v40 = vpack.c.bf16 %v32, %v31
    %v41 = vpack.c.bf16 %v37, %v36
    %v42 = vpack.c.bf16 %v34, %v33
    %v43 = vpack.c.bf16 %v39, %v38
    %v44 = vld [vmem:[%s1] sm:$0x7]
    %s45 = scalar_lea.vmem %s1, 4
    %v46 = vld [vmem:[%s45] sm:$0x7]
    %v47 = vld [vmem:[%s2] sm:$0xf]
    %v48 = vld [vmem:[%s2 + $0x4] sm:$0xf]
    %v49 = vld [vmem:[%s2 + $0x8] sm:$0xf]
    %v50 = vld [vmem:[%s2 + $0xc] sm:$0xf]
    %v51 = vld [vmem:[%s3] sm:$0xff]
    %v52 = vld [vmem:[%s3 + $0x8] sm:$0xff]
    %v53 = vld [vmem:[%s3 + $0x10] sm:$0xff]
    %v54 = vld [vmem:[%s3 + $0x18] sm:$0xff]
    %56 = vset.pattern.permute.xlu0 0
    %57 = vperm.xlu0 %56, %v51
    %v58 = vpop.permute.xlu0 %57
    %61 = vset.pattern.permute.xlu0 0
    %62 = vperm.xlu0 %61, %v52
    %v63 = vpop.permute.xlu0 %62
    %66 = vset.pattern.permute.xlu0 0
    %67 = vperm.xlu0 %66, %v53
    %v68 = vpop.permute.xlu0 %67
    %71 = vset.pattern.permute.xlu0 0
    %72 = vperm.xlu0 %71, %v54
    %v73 = vpop.permute.xlu0 %72
    %v75 = vperm.slane %v44, 0
    %v76 = vperm.slane %v46, 0
    %v77 = vmul.f32 %v58, %v75
    %v78 = vmul.f32 %v58, %v76
    %v79 = vmul.f32 %v63, %v75
    %v80 = vmul.f32 %v63, %v76
    %v81 = vmul.f32 %v68, %v75
    %v82 = vmul.f32 %v68, %v76
    %v83 = vmul.f32 %v73, %v75
    %v84 = vmul.f32 %v73, %v76
    %v89 = vunpack.c.l.b16 %v47
    %v90 = vunpack.c.l.b16 %v48
    %v91 = vunpack.c.l.b16 %v49
    %v92 = vunpack.c.l.b16 %v50
    %v93 = vpack.c.b16 %v90, %v89
    %v94 = vpack.c.b16 %v92, %v91
    %vm95 = vcmask 261120
    %v97 = vsel %vm95, %v93, 0
    %v100 = vsel %vm95, %v94, 0
    %102 = vmatpush.bf16.msra.mxu0 0
    %103 = vmatpush.bf16.msra.mxu0 0
    %104 = vmatpush.bf16.msra.mxu0 0
    %105 = vmatpush.bf16.msra.mxu0 0
    %106 = vmatpush.bf16.msra.mxu0 0
    %107 = vmatpush.bf16.msra.mxu0 0
    %108 = vmatpush.bf16.msra.mxu0 %v42
    %109 = vmatpush.bf16.msra.mxu0 %v40
    %110 = vmatmul.bf16.gmra.mxu0 %v97
    %v111 = vpop.f32.mrf.mxu0
    %v112 = vadd.f32 %v77, %v111
    %v113 = vpop.f32.mrf.mxu0
    %v114 = vadd.f32 %v79, %v113
    %115 = vmatmul.bf16.gmra.mxu0 %v100
    %v116 = vpop.f32.mrf.mxu0
    %v117 = vadd.f32 %v81, %v116
    %v118 = vpop.f32.mrf.mxu0
    %v119 = vadd.f32 %v83, %v118
    %120 = vdwg.mxu0
    %121 = vmatpush.bf16.msra.mxu0 0
    %122 = vmatpush.bf16.msra.mxu0 0
    %123 = vmatpush.bf16.msra.mxu0 0
    %124 = vmatpush.bf16.msra.mxu0 0
    %125 = vmatpush.bf16.msra.mxu0 0
    %126 = vmatpush.bf16.msra.mxu0 0
    %127 = vmatpush.bf16.msra.mxu0 %v43
    %128 = vmatpush.bf16.msra.mxu0 %v41
    %129 = vmatmul.bf16.gmra.mxu0 %v97
    %v130 = vpop.f32.mrf.mxu0
    %v131 = vadd.f32 %v78, %v130
    %v132 = vpop.f32.mrf.mxu0
    %v133 = vadd.f32 %v80, %v132
    %134 = vmatmul.bf16.gmra.mxu0 %v100
    %v135 = vpop.f32.mrf.mxu0
    %v136 = vadd.f32 %v82, %v135
    %v137 = vpop.f32.mrf.mxu0
    %v138 = vadd.f32 %v84, %v137
    %139 = vdwg.mxu0
    %140 = vset.pattern.permute.xlu0 1
    %141 = vperm.xlu0 %140, %v51
    %v142 = vpop.permute.xlu0 %141
    %144 = vset.pattern.permute.xlu0 1
    %145 = vperm.xlu0 %144, %v52
    %v146 = vpop.permute.xlu0 %145
    %148 = vset.pattern.permute.xlu0 1
    %149 = vperm.xlu0 %148, %v53
    %v150 = vpop.permute.xlu0 %149
    %152 = vset.pattern.permute.xlu0 1
    %153 = vperm.xlu0 %152, %v54
    %v154 = vpop.permute.xlu0 %153
    %v156 = vperm.slane %v44, 1
    %v157 = vperm.slane %v46, 1
    %v158 = vmul.f32 %v142, %v156
    %v159 = vmul.f32 %v142, %v157
    %v160 = vmul.f32 %v146, %v156
    %v161 = vmul.f32 %v146, %v157
    %v162 = vmul.f32 %v150, %v156
    %v163 = vmul.f32 %v150, %v157
    %v164 = vmul.f32 %v154, %v156
    %v165 = vmul.f32 %v154, %v157
    %v166 = vadd.f32 %v112, %v158
    %v167 = vadd.f32 %v131, %v159
    %v168 = vadd.f32 %v114, %v160
    %v169 = vadd.f32 %v133, %v161
    %v170 = vadd.f32 %v117, %v162
    %v171 = vadd.f32 %v136, %v163
    %v172 = vadd.f32 %v119, %v164
    %v173 = vadd.f32 %v138, %v165
    %174 = vset.pattern.permute.xlu0 2
    %175 = vperm.xlu0 %174, %v51
    %v176 = vpop.permute.xlu0 %175
    %178 = vset.pattern.permute.xlu0 2
    %179 = vperm.xlu0 %178, %v52
    %v180 = vpop.permute.xlu0 %179
    %182 = vset.pattern.permute.xlu0 2
    %183 = vperm.xlu0 %182, %v53
    %v184 = vpop.permute.xlu0 %183
    %186 = vset.pattern.permute.xlu0 2
    %187 = vperm.xlu0 %186, %v54
    %v188 = vpop.permute.xlu0 %187
    %v190 = vperm.slane %v44, 2
    %v191 = vperm.slane %v46, 2
    %v192 = vmul.f32 %v176, %v190
    %v193 = vmul.f32 %v176, %v191
    %v194 = vmul.f32 %v180, %v190
    %v195 = vmul.f32 %v180, %v191
    %v196 = vmul.f32 %v184, %v190
    %v197 = vmul.f32 %v184, %v191
    %v198 = vmul.f32 %v188, %v190
    %v199 = vmul.f32 %v188, %v191
    %v200 = vadd.f32 %v166, %v192
    %v201 = vadd.f32 %v167, %v193
    %v202 = vadd.f32 %v168, %v194
    %v203 = vadd.f32 %v169, %v195
    %v204 = vadd.f32 %v170, %v196
    %v205 = vadd.f32 %v171, %v197
    %v206 = vadd.f32 %v172, %v198
    %v207 = vadd.f32 %v173, %v199
    %v208 = vadd.f32 %v200, %v201
    %209 = vadd.xlane.f32.xlu0 %v208
    %v210 = vpop.xlane.xlu0 %209
    %v211 = vadd.f32 %v202, %v203
    %212 = vadd.xlane.f32.xlu0 %v211
    %v213 = vpop.xlane.xlu0 %212
    %v214 = vadd.f32 %v204, %v205
    %215 = vadd.xlane.f32.xlu0 %v214
    %v216 = vpop.xlane.xlu0 %215
    %v217 = vadd.f32 %v206, %v207
    %218 = vadd.xlane.f32.xlu0 %v217
    %v219 = vpop.xlane.xlu0 %218
    %v220 = vmul.f32 %v210, 0.00390625
    %v221 = vmul.f32 %v213, 0.00390625
    %v222 = vmul.f32 %v216, 0.00390625
    %v223 = vmul.f32 %v219, 0.00390625
    %v224 = vsub.f32 %v200, %v220
    %v225 = vsub.f32 %v201, %v220
    %v226 = vsub.f32 %v202, %v221
    %v227 = vsub.f32 %v203, %v221
    %v228 = vsub.f32 %v204, %v222
    %v229 = vsub.f32 %v205, %v222
    %v230 = vsub.f32 %v206, %v223
    %v231 = vsub.f32 %v207, %v223
    %v232 = vmul.f32 %v224, %v224
    %v233 = vmul.f32 %v225, %v225
    %v234 = vmul.f32 %v226, %v226
    %v235 = vmul.f32 %v227, %v227
    %v236 = vmul.f32 %v228, %v228
    %v237 = vmul.f32 %v229, %v229
    %v238 = vmul.f32 %v230, %v230
    %v239 = vmul.f32 %v231, %v231
    %v240 = vadd.f32 %v232, %v233
    %241 = vadd.xlane.f32.xlu0 %v240
    %v242 = vpop.xlane.xlu0 %241
    %v243 = vadd.f32 %v234, %v235
    %244 = vadd.xlane.f32.xlu0 %v243
    %v245 = vpop.xlane.xlu0 %244
    %v246 = vadd.f32 %v236, %v237
    %247 = vadd.xlane.f32.xlu0 %v246
    %v248 = vpop.xlane.xlu0 %247
    %v249 = vadd.f32 %v238, %v239
    %250 = vadd.xlane.f32.xlu0 %v249
    %v251 = vpop.xlane.xlu0 %250
    %v252 = vmul.f32 %v242, 0.00390625
    %v253 = vmul.f32 %v245, 0.00390625
    %v254 = vmul.f32 %v248, 0.00390625
    %v255 = vmul.f32 %v251, 0.00390625
    %v256 = vadd.f32 %v252, 1e-05
    %v257 = vadd.f32 %v253, 1e-05
    %v258 = vadd.f32 %v254, 1e-05
    %v259 = vadd.f32 %v255, 1e-05
    %v260 = vrsqrt.pop %v256
    %v261 = vmul.f32 %v260, %v256
    %v262 = vmul.f32 %v261, %v260
    %v263 = vmul.f32 0.5, %v262
    %v264 = vsub.f32 1.5, %v263
    %v265 = vmul.f32 %v260, %v264
    %vm266 = vweird.f32 %v256
    %vm267 = vweird.f32 %v260
    %vm268 = vmor %vm266, %vm267
    %v269 = vsel %vm268, %v260, %v265
    %v270 = vrsqrt.pop %v257
    %v271 = vmul.f32 %v270, %v257
    %v272 = vmul.f32 %v271, %v270
    %v273 = vmul.f32 0.5, %v272
    %v274 = vsub.f32 1.5, %v273
    %v275 = vmul.f32 %v270, %v274
    %vm276 = vweird.f32 %v257
    %vm277 = vweird.f32 %v270
    %vm278 = vmor %vm276, %vm277
    %v279 = vsel %vm278, %v270, %v275
    %v280 = vrsqrt.pop %v258
    %v281 = vmul.f32 %v280, %v258
    %v282 = vmul.f32 %v281, %v280
    %v283 = vmul.f32 0.5, %v282
    %v284 = vsub.f32 1.5, %v283
    %v285 = vmul.f32 %v280, %v284
    %vm286 = vweird.f32 %v258
    %vm287 = vweird.f32 %v280
    %vm288 = vmor %vm286, %vm287
    %v289 = vsel %vm288, %v280, %v285
    %v290 = vrsqrt.pop %v259
    %v291 = vmul.f32 %v290, %v259
    %v292 = vmul.f32 %v291, %v290
    %v293 = vmul.f32 0.5, %v292
    %v294 = vsub.f32 1.5, %v293
    %v295 = vmul.f32 %v290, %v294
    %vm296 = vweird.f32 %v259
    %vm297 = vweird.f32 %v290
    %vm298 = vmor %vm296, %vm297
    %v299 = vsel %vm298, %v290, %v295
    %v300 = vld [vmem:[%s4] sm:$0xff]
    %v301 = vld [vmem:[%s4 + $0x8] sm:$0xff]
    %v302 = vld [vmem:[%s4 + $0x10] sm:$0xff]
    %v303 = vld [vmem:[%s4 + $0x18] sm:$0xff]
    %v304 = vmul.f32 %v300, %v269
    %v305 = vmul.f32 %v301, %v279
    %v306 = vmul.f32 %v302, %v289
    %v307 = vmul.f32 %v303, %v299
    %v308 = vld [vmem:[%s5] sm:$0xff]
    %v309 = vld [vmem:[%s5 + $0x8] sm:$0xff]
    %v310 = vld [vmem:[%s5 + $0x10] sm:$0xff]
    %v311 = vld [vmem:[%s5 + $0x18] sm:$0xff]
    %v312 = vmul.f32 %v220, %v304
    %v313 = vmul.f32 %v221, %v305
    %v314 = vmul.f32 %v222, %v306
    %v315 = vmul.f32 %v223, %v307
    %v316 = vsub.f32 %v308, %v312
    %v317 = vsub.f32 %v309, %v313
    %v318 = vsub.f32 %v310, %v314
    %v319 = vsub.f32 %v311, %v315
    %321 = vset.pattern.permute.xlu0 0
    %322 = vperm.xlu0 %321, %v304
    %v323 = vpop.permute.xlu0 %322
    %326 = vset.pattern.permute.xlu0 0
    %327 = vperm.xlu0 %326, %v305
    %v328 = vpop.permute.xlu0 %327
    %331 = vset.pattern.permute.xlu0 0
    %332 = vperm.xlu0 %331, %v306
    %v333 = vpop.permute.xlu0 %332
    %336 = vset.pattern.permute.xlu0 0
    %337 = vperm.xlu0 %336, %v307
    %v338 = vpop.permute.xlu0 %337
    %v340 = vmul.f32 %v200, %v323
    %v341 = vmul.f32 %v201, %v323
    %v342 = vmul.f32 %v202, %v328
    %v343 = vmul.f32 %v203, %v328
    %v344 = vmul.f32 %v204, %v333
    %v345 = vmul.f32 %v205, %v333
    %v346 = vmul.f32 %v206, %v338
    %v347 = vmul.f32 %v207, %v338
    %349 = vset.pattern.permute.xlu0 0
    %350 = vperm.xlu0 %349, %v316
    %v351 = vpop.permute.xlu0 %350
    %354 = vset.pattern.permute.xlu0 0
    %355 = vperm.xlu0 %354, %v317
    %v356 = vpop.permute.xlu0 %355
    %359 = vset.pattern.permute.xlu0 0
    %360 = vperm.xlu0 %359, %v318
    %v361 = vpop.permute.xlu0 %360
    %364 = vset.pattern.permute.xlu0 0
    %365 = vperm.xlu0 %364, %v319
    %v366 = vpop.permute.xlu0 %365
    %v368 = vadd.f32 %v340, %v351
    %v369 = vadd.f32 %v341, %v351
    %v370 = vadd.f32 %v342, %v356
    %v371 = vadd.f32 %v343, %v356
    %v372 = vadd.f32 %v344, %v361
    %v373 = vadd.f32 %v345, %v361
    %v374 = vadd.f32 %v346, %v366
    %v375 = vadd.f32 %v347, %v366
    %v376 = vmax.f32 %v368, 0.0
    %v377 = vmax.f32 %v369, 0.0
    %v378 = vmax.f32 %v370, 0.0
    %v379 = vmax.f32 %v371, 0.0
    %v380 = vmax.f32 %v372, 0.0
    %v381 = vmax.f32 %v373, 0.0
    %v382 = vmax.f32 %v374, 0.0
    %v383 = vmax.f32 %v375, 0.0
    %v384 = vpack.c.bf16 %v378, %v376
    %v385 = vpack.c.bf16 %v379, %v377
    %v386 = vpack.c.bf16 %v382, %v380
    %v387 = vpack.c.bf16 %v383, %v381
    %v388 = vld [vmem:[%s6] sm:$0xf]
    %v389 = vld [vmem:[%s6 + $0x4] sm:$0xf]
    %v390 = vld [vmem:[%s6 + $0x8] sm:$0xf]
    %v391 = vld [vmem:[%s6 + $0xc] sm:$0xf]
    %v392 = vld [vmem:[%s6 + $0x10] sm:$0xf]
    %v393 = vld [vmem:[%s6 + $0x14] sm:$0xf]
    %v394 = vld [vmem:[%s7] sm:$0xff]
    %v395 = vld [vmem:[%s7 + $0x8] sm:$0xff]
    %v396 = vld [vmem:[%s7 + $0x10] sm:$0xff]
    %v397 = vld [vmem:[%s7 + $0x18] sm:$0xff]
    %v398 = vld [vmem:[%s7 + $0x20] sm:$0xff]
    %v399 = vld [vmem:[%s7 + $0x28] sm:$0xff]
    %401 = vset.pattern.permute.xlu0 0
    %402 = vperm.xlu0 %401, %v394
    %v403 = vpop.permute.xlu0 %402
    %406 = vset.pattern.permute.xlu0 0
    %407 = vperm.xlu0 %406, %v395
    %v408 = vpop.permute.xlu0 %407
    %411 = vset.pattern.permute.xlu0 0
    %412 = vperm.xlu0 %411, %v396
    %v413 = vpop.permute.xlu0 %412
    %416 = vset.pattern.permute.xlu0 0
    %417 = vperm.xlu0 %416, %v397
    %v418 = vpop.permute.xlu0 %417
    %421 = vset.pattern.permute.xlu0 0
    %422 = vperm.xlu0 %421, %v398
    %v423 = vpop.permute.xlu0 %422
    %426 = vset.pattern.permute.xlu0 0
    %427 = vperm.xlu0 %426, %v399
    %v428 = vpop.permute.xlu0 %427
    %v436 = vunpack.c.l.b16 %v388
    %v437 = vunpack.c.l.b16 %v389
    %v438 = vunpack.c.l.b16 %v390
    %v439 = vunpack.c.l.b16 %v391
    %v440 = vunpack.c.l.b16 %v392
    %v441 = vunpack.c.l.b16 %v393
    %v442 = vpack.c.b16 %v437, %v436
    %v443 = vpack.c.b16 %v439, %v438
    %v444 = vpack.c.b16 %v441, %v440
    %v446 = vsel %vm95, %v442, 0
    %v449 = vsel %vm95, %v443, 0
    %v452 = vsel %vm95, %v444, 0
    %454 = vmatpush.bf16.msra.mxu0 0
    %455 = vmatpush.bf16.msra.mxu0 0
    %456 = vmatpush.bf16.msra.mxu0 0
    %457 = vmatpush.bf16.msra.mxu0 0
    %458 = vmatpush.bf16.msra.mxu0 0
    %459 = vmatpush.bf16.msra.mxu0 0
    %460 = vmatpush.bf16.msra.mxu0 %v386
    %461 = vmatpush.bf16.msra.mxu0 %v384
    %462 = vmatmul.bf16.gmra.mxu0 %v446
    %v463 = vpop.f32.mrf.mxu0
    %v464 = vadd.f32 %v403, %v463
    %v465 = vpop.f32.mrf.mxu0
    %v466 = vadd.f32 %v408, %v465
    %467 = vmatmul.bf16.gmra.mxu0 %v449
    %v468 = vpop.f32.mrf.mxu0
    %v469 = vadd.f32 %v413, %v468
    %v470 = vpop.f32.mrf.mxu0
    %v471 = vadd.f32 %v418, %v470
    %472 = vmatmul.bf16.gmra.mxu0 %v452
    %v473 = vpop.f32.mrf.mxu0
    %v474 = vadd.f32 %v423, %v473
    %v475 = vpop.f32.mrf.mxu0
    %v476 = vadd.f32 %v428, %v475
    %477 = vdwg.mxu0
    %478 = vmatpush.bf16.msra.mxu0 0
    %479 = vmatpush.bf16.msra.mxu0 0
    %480 = vmatpush.bf16.msra.mxu0 0
    %481 = vmatpush.bf16.msra.mxu0 0
    %482 = vmatpush.bf16.msra.mxu0 0
    %483 = vmatpush.bf16.msra.mxu0 0
    %484 = vmatpush.bf16.msra.mxu0 %v387
    %485 = vmatpush.bf16.msra.mxu0 %v385
    %486 = vmatmul.bf16.gmra.mxu0 %v446
    %v487 = vpop.f32.mrf.mxu0
    %v488 = vadd.f32 %v403, %v487
    %v489 = vpop.f32.mrf.mxu0
    %v490 = vadd.f32 %v408, %v489
    %491 = vmatmul.bf16.gmra.mxu0 %v449
    %v492 = vpop.f32.mrf.mxu0
    %v493 = vadd.f32 %v413, %v492
    %v494 = vpop.f32.mrf.mxu0
    %v495 = vadd.f32 %v418, %v494
    %496 = vmatmul.bf16.gmra.mxu0 %v452
    %v497 = vpop.f32.mrf.mxu0
    %v498 = vadd.f32 %v423, %v497
    %v499 = vpop.f32.mrf.mxu0
    %v500 = vadd.f32 %v428, %v499
    %501 = vdwg.mxu0
    %v502 = vpack.c.bf16 %v490, %v466
    %v503 = vpack.c.bf16 %v493, %v469
    %v504 = vpack.c.bf16 %v495, %v471
    %v505 = vpack.c.bf16 %v498, %v474
    %v506 = vpack.c.bf16 %v500, %v476
    %507 = vxpose.xlu0.b32.start [1/16] %v464, 128
    %508 = vxpose.xlu0.b32.cont [2/16] 0.0, 128
    %509 = vxpose.xlu0.b32.cont [3/16] 0.0, 128
    %510 = vxpose.xlu0.b32.cont [4/16] 0.0, 128
    %511 = vxpose.xlu0.b32.cont [5/16] 0.0, 128
    %512 = vxpose.xlu0.b32.cont [6/16] 0.0, 128
    %513 = vxpose.xlu0.b32.cont [7/16] 0.0, 128
    %514 = vxpose.xlu0.b32.cont [8/16] 0.0, 128
    %515 = vxpose.xlu0.b32.cont [9/16] 0.0, 128
    %516 = vxpose.xlu0.b32.cont [10/16] 0.0, 128
    %517 = vxpose.xlu0.b32.cont [11/16] 0.0, 128
    %518 = vxpose.xlu0.b32.cont [12/16] 0.0, 128
    %519 = vxpose.xlu0.b32.cont [13/16] 0.0, 128
    %520 = vxpose.xlu0.b32.cont [14/16] 0.0, 128
    %521 = vxpose.xlu0.b32.cont [15/16] 0.0, 128
    %522 = vxpose.xlu0.b32.end [16/16] 0.0, 128
    %v523 = vpop.trf.xlu0
    %v524 = vpop.trf.xlu0
    %v525 = vpop.trf.xlu0
    %v526 = vpop.trf.xlu0
    %v527 = vpop.trf.xlu0
    %v528 = vpop.trf.xlu0
    %v529 = vpop.trf.xlu0
    %v530 = vpop.trf.xlu0
    %v531 = vpop.trf.xlu0
    %v532 = vpop.trf.xlu0
    %v533 = vpop.trf.xlu0
    %v534 = vpop.trf.xlu0
    %v535 = vpop.trf.xlu0
    %v536 = vpop.trf.xlu0
    %v537 = vpop.trf.xlu0
    %v538 = vpop.trf.xlu0
    %v539 = vpack.c.bf16 %v524, %v523
    %v540 = vpack.c.bf16 %v526, %v525
    %v541 = vpack.c.bf16 %v528, %v527
    %v542 = vpack.c.bf16 %v530, %v529
    %v543 = vpack.c.bf16 %v532, %v531
    %v544 = vpack.c.bf16 %v534, %v533
    %v545 = vpack.c.bf16 %v536, %v535
    %v546 = vpack.c.bf16 %v538, %v537
    %vm547 = vcmask 64512
    %v549 = vsel %vm547, %v539, 0
    %v552 = vsel %vm547, %v540, 0
    %v555 = vsel %vm547, %v541, 0
    %v558 = vsel %vm547, %v542, 0
    %v561 = vsel %vm547, %v543, 0
    %v564 = vsel %vm547, %v544, 0
    %v567 = vsel %vm547, %v545, 0
    %v570 = vsel %vm547, %v546, 0
    %vm572 = vcmask 1043456
    %v574 = vsel %vm572, %v502, 0
    %576 = vmatpush.bf16.msra.mxu0 0
    %577 = vmatpush.bf16.msra.mxu0 0
    %578 = vmatpush.bf16.msra.mxu0 0
    %579 = vmatpush.bf16.msra.mxu0 0
    %580 = vmatpush.bf16.msra.mxu0 0
    %581 = vmatpush.bf16.msra.mxu0 0
    %582 = vmatpush.bf16.msra.mxu0 0
    %583 = vmatpush.bf16.msra.mxu0 %v574
    %584 = vmatmul.bf16.gmra.mxu0 %v549
    %v585 = vpop.f32.mrf.mxu0
    %v586 = vadd.f32 0.0, %v585
    %v587 = vpop.f32.mrf.mxu0
    %v588 = vadd.f32 0.0, %v587
    %589 = vmatmul.bf16.gmra.mxu0 %v552
    %v590 = vpop.f32.mrf.mxu0
    %v591 = vadd.f32 0.0, %v590
    %v592 = vpop.f32.mrf.mxu0
    %v593 = vadd.f32 0.0, %v592
    %594 = vmatmul.bf16.gmra.mxu0 %v555
    %v595 = vpop.f32.mrf.mxu0
    %v596 = vadd.f32 0.0, %v595
    %v597 = vpop.f32.mrf.mxu0
    %v598 = vadd.f32 0.0, %v597
    %599 = vmatmul.bf16.gmra.mxu0 %v558
    %v600 = vpop.f32.mrf.mxu0
    %v601 = vadd.f32 0.0, %v600
    %v602 = vpop.f32.mrf.mxu0
    %v603 = vadd.f32 0.0, %v602
    %604 = vmatmul.bf16.gmra.mxu0 %v561
    %v605 = vpop.f32.mrf.mxu0
    %v606 = vadd.f32 0.0, %v605
    %v607 = vpop.f32.mrf.mxu0
    %v608 = vadd.f32 0.0, %v607
    %609 = vmatmul.bf16.gmra.mxu0 %v564
    %v610 = vpop.f32.mrf.mxu0
    %v611 = vadd.f32 0.0, %v610
    %v612 = vpop.f32.mrf.mxu0
    %v613 = vadd.f32 0.0, %v612
    %614 = vmatmul.bf16.gmra.mxu0 %v567
    %v615 = vpop.f32.mrf.mxu0
    %v616 = vadd.f32 0.0, %v615
    %v617 = vpop.f32.mrf.mxu0
    %v618 = vadd.f32 0.0, %v617
    %619 = vmatmul.bf16.gmra.mxu0 %v570
    %v620 = vpop.f32.mrf.mxu0
    %v621 = vadd.f32 0.0, %v620
    %v622 = vpop.f32.mrf.mxu0
    %v623 = vadd.f32 0.0, %v622
    %624 = vdwg.mxu0
    %625 = vmax.xlane.f32.xlu0 %v586
    %v626 = vpop.xlane.xlu0 %625
    %627 = vmax.xlane.f32.xlu0 %v588
    %v628 = vpop.xlane.xlu0 %627
    %629 = vmax.xlane.f32.xlu0 %v591
    %v630 = vpop.xlane.xlu0 %629
    %631 = vmax.xlane.f32.xlu0 %v593
    %v632 = vpop.xlane.xlu0 %631
    %633 = vmax.xlane.f32.xlu0 %v596
    %v634 = vpop.xlane.xlu0 %633
    %635 = vmax.xlane.f32.xlu0 %v598
    %v636 = vpop.xlane.xlu0 %635
    %637 = vmax.xlane.f32.xlu0 %v601
    %v638 = vpop.xlane.xlu0 %637
    %639 = vmax.xlane.f32.xlu0 %v603
    %v640 = vpop.xlane.xlu0 %639
    %641 = vmax.xlane.f32.xlu0 %v606
    %v642 = vpop.xlane.xlu0 %641
    %643 = vmax.xlane.f32.xlu0 %v608
    %v644 = vpop.xlane.xlu0 %643
    %645 = vmax.xlane.f32.xlu0 %v611
    %v646 = vpop.xlane.xlu0 %645
    %647 = vmax.xlane.f32.xlu0 %v613
    %v648 = vpop.xlane.xlu0 %647
    %649 = vmax.xlane.f32.xlu0 %v616
    %v650 = vpop.xlane.xlu0 %649
    %651 = vmax.xlane.f32.xlu0 %v618
    %v652 = vpop.xlane.xlu0 %651
    %653 = vmax.xlane.f32.xlu0 %v621
    %v654 = vpop.xlane.xlu0 %653
    %655 = vmax.xlane.f32.xlu0 %v623
    %v656 = vpop.xlane.xlu0 %655
    %v657 = vsub.f32 %v586, %v626
    %v658 = vsub.f32 %v588, %v628
    %v659 = vsub.f32 %v591, %v630
    %v660 = vsub.f32 %v593, %v632
    %v661 = vsub.f32 %v596, %v634
    %v662 = vsub.f32 %v598, %v636
    %v663 = vsub.f32 %v601, %v638
    %v664 = vsub.f32 %v603, %v640
    %v665 = vsub.f32 %v606, %v642
    %v666 = vsub.f32 %v608, %v644
    %v667 = vsub.f32 %v611, %v646
    %v668 = vsub.f32 %v613, %v648
    %v669 = vsub.f32 %v616, %v650
    %v670 = vsub.f32 %v618, %v652
    %v671 = vsub.f32 %v621, %v654
    %v672 = vsub.f32 %v623, %v656
    %v673 = vmul.f32 %v657, 1.442695
    %v674 = vpow.pop %v673
    %v675 = vmul.f32 %v658, 1.442695
    %v676 = vpow.pop %v675
    %v677 = vmul.f32 %v659, 1.442695
    %v678 = vpow.pop %v677
    %v679 = vmul.f32 %v660, 1.442695
    %v680 = vpow.pop %v679
    %v681 = vmul.f32 %v661, 1.442695
    %v682 = vpow.pop %v681
    %v683 = vmul.f32 %v662, 1.442695
    %v684 = vpow.pop %v683
    %v685 = vmul.f32 %v663, 1.442695
    %v686 = vpow.pop %v685
    %v687 = vmul.f32 %v664, 1.442695
    %v688 = vpow.pop %v687
    %v689 = vmul.f32 %v665, 1.442695
    %v690 = vpow.pop %v689
    %v691 = vmul.f32 %v666, 1.442695
    %v692 = vpow.pop %v691
    %v693 = vmul.f32 %v667, 1.442695
    %v694 = vpow.pop %v693
    %v695 = vmul.f32 %v668, 1.442695
    %v696 = vpow.pop %v695
    %v697 = vmul.f32 %v669, 1.442695
    %v698 = vpow.pop %v697
    %v699 = vmul.f32 %v670, 1.442695
    %v700 = vpow.pop %v699
    %v701 = vmul.f32 %v671, 1.442695
    %v702 = vpow.pop %v701
    %v703 = vmul.f32 %v672, 1.442695
    %v704 = vpow.pop %v703
    %705 = vadd.xlane.f32.xlu0 %v674
    %v706 = vpop.xlane.xlu0 %705
    %707 = vadd.xlane.f32.xlu0 %v676
    %v708 = vpop.xlane.xlu0 %707
    %709 = vadd.xlane.f32.xlu0 %v678
    %v710 = vpop.xlane.xlu0 %709
    %711 = vadd.xlane.f32.xlu0 %v680
    %v712 = vpop.xlane.xlu0 %711
    %713 = vadd.xlane.f32.xlu0 %v682
    %v714 = vpop.xlane.xlu0 %713
    %715 = vadd.xlane.f32.xlu0 %v684
    %v716 = vpop.xlane.xlu0 %715
    %717 = vadd.xlane.f32.xlu0 %v686
    %v718 = vpop.xlane.xlu0 %717
    %719 = vadd.xlane.f32.xlu0 %v688
    %v720 = vpop.xlane.xlu0 %719
    %721 = vadd.xlane.f32.xlu0 %v690
    %v722 = vpop.xlane.xlu0 %721
    %723 = vadd.xlane.f32.xlu0 %v692
    %v724 = vpop.xlane.xlu0 %723
    %725 = vadd.xlane.f32.xlu0 %v694
    %v726 = vpop.xlane.xlu0 %725
    %727 = vadd.xlane.f32.xlu0 %v696
    %v728 = vpop.xlane.xlu0 %727
    %729 = vadd.xlane.f32.xlu0 %v698
    %v730 = vpop.xlane.xlu0 %729
    %731 = vadd.xlane.f32.xlu0 %v700
    %v732 = vpop.xlane.xlu0 %731
    %733 = vadd.xlane.f32.xlu0 %v702
    %v734 = vpop.xlane.xlu0 %733
    %735 = vadd.xlane.f32.xlu0 %v704
    %v736 = vpop.xlane.xlu0 %735
    %v737 = vrcp.pop %v706
    %v738 = vrcp.pop %v708
    %v739 = vrcp.pop %v710
    %v740 = vrcp.pop %v712
    %v741 = vrcp.pop %v714
    %v742 = vrcp.pop %v716
    %v743 = vrcp.pop %v718
    %v744 = vrcp.pop %v720
    %v745 = vrcp.pop %v722
    %v746 = vrcp.pop %v724
    %v747 = vrcp.pop %v726
    %v748 = vrcp.pop %v728
    %v749 = vrcp.pop %v730
    %v750 = vrcp.pop %v732
    %v751 = vrcp.pop %v734
    %v752 = vrcp.pop %v736
    %v753 = vmul.f32 %v674, %v737
    %v754 = vmul.f32 %v676, %v738
    %v755 = vmul.f32 %v678, %v739
    %v756 = vmul.f32 %v680, %v740
    %v757 = vmul.f32 %v682, %v741
    %v758 = vmul.f32 %v684, %v742
    %v759 = vmul.f32 %v686, %v743
    %v760 = vmul.f32 %v688, %v744
    %v761 = vmul.f32 %v690, %v745
    %v762 = vmul.f32 %v692, %v746
    %v763 = vmul.f32 %v694, %v747
    %v764 = vmul.f32 %v696, %v748
    %v765 = vmul.f32 %v698, %v749
    %v766 = vmul.f32 %v700, %v750
    %v767 = vmul.f32 %v702, %v751
    %v768 = vmul.f32 %v704, %v752
    %v769 = vpack.c.bf16 %v754, %v753
    %v770 = vpack.c.bf16 %v756, %v755
    %v771 = vpack.c.bf16 %v758, %v757
    %v772 = vpack.c.bf16 %v760, %v759
    %v773 = vpack.c.bf16 %v762, %v761
    %v774 = vpack.c.bf16 %v764, %v763
    %v775 = vpack.c.bf16 %v766, %v765
    %v776 = vpack.c.bf16 %v768, %v767
    %v781 = vunpack.c.l.b16 %v503
    %v782 = vunpack.c.l.b16 %v504
    %v783 = vunpack.c.l.b16 %v505
    %v784 = vunpack.c.l.b16 %v506
    %v785 = vpack.c.b16 %v782, %v781
    %v786 = vpack.c.b16 %v784, %v783
    %789 = vmatpush.bf16.xpose.msra.mxu0 %v776
    %790 = vmatpush.bf16.xpose.msra.mxu0 %v775
    %791 = vmatpush.bf16.xpose.msra.mxu0 %v774
    %792 = vmatpush.bf16.xpose.msra.mxu0 %v773
    %793 = vmatpush.bf16.xpose.msra.mxu0 %v772
    %794 = vmatpush.bf16.xpose.msra.mxu0 %v771
    %795 = vmatpush.bf16.xpose.msra.mxu0 %v770
    %796 = vmatpush.bf16.xpose.msra.mxu0 %v769
    %797 = vmatmul.bf16.gmra.mxu0 %v785
    %v798 = vpop.f32.mrf.mxu0
    %v799 = vadd.f32 %v376, %v798
    %v800 = vpop.f32.mrf.mxu0
    %v801 = vadd.f32 %v378, %v800
    %802 = vmatmul.bf16.gmra.mxu0 %v786
    %v803 = vpop.f32.mrf.mxu0
    %v804 = vadd.f32 %v380, %v803
    %v805 = vpop.f32.mrf.mxu0
    %v806 = vadd.f32 %v382, %v805
    %807 = vdwg.mxu0
    %808 = vst [vmem:[#allocation2] sm:$0xff] %v799
    %809 = vst [vmem:[#allocation2 + $0x8] sm:$0xff] %v801
    %810 = vst [vmem:[#allocation2 + $0x10] sm:$0xff] %v804
    %811 = vst [vmem:[#allocation2 + $0x18] sm:$0xff] %v806
    %812 = vxpose.xlu0.b32.start [1/16] %v488, 128
    %813 = vxpose.xlu0.b32.cont [2/16] 0.0, 128
    %814 = vxpose.xlu0.b32.cont [3/16] 0.0, 128
    %815 = vxpose.xlu0.b32.cont [4/16] 0.0, 128
    %816 = vxpose.xlu0.b32.cont [5/16] 0.0, 128
    %817 = vxpose.xlu0.b32.cont [6/16] 0.0, 128
    %818 = vxpose.xlu0.b32.cont [7/16] 0.0, 128
    %819 = vxpose.xlu0.b32.cont [8/16] 0.0, 128
    %820 = vxpose.xlu0.b32.cont [9/16] 0.0, 128
    %821 = vxpose.xlu0.b32.cont [10/16] 0.0, 128
    %822 = vxpose.xlu0.b32.cont [11/16] 0.0, 128
    %823 = vxpose.xlu0.b32.cont [12/16] 0.0, 128
    %824 = vxpose.xlu0.b32.cont [13/16] 0.0, 128
    %825 = vxpose.xlu0.b32.cont [14/16] 0.0, 128
    %826 = vxpose.xlu0.b32.cont [15/16] 0.0, 128
    %827 = vxpose.xlu0.b32.end [16/16] 0.0, 128
    %v828 = vpop.trf.xlu0
    %v829 = vpop.trf.xlu0
    %v830 = vpop.trf.xlu0
    %v831 = vpop.trf.xlu0
    %v832 = vpop.trf.xlu0
    %v833 = vpop.trf.xlu0
    %v834 = vpop.trf.xlu0
    %v835 = vpop.trf.xlu0
    %v836 = vpop.trf.xlu0
    %v837 = vpop.trf.xlu0
    %v838 = vpop.trf.xlu0
    %v839 = vpop.trf.xlu0
    %v840 = vpop.trf.xlu0
    %v841 = vpop.trf.xlu0
    %v842 = vpop.trf.xlu0
    %v843 = vpop.trf.xlu0
    %v844 = vpack.c.bf16 %v829, %v828
    %v845 = vpack.c.bf16 %v831, %v830
    %v846 = vpack.c.bf16 %v833, %v832
    %v847 = vpack.c.bf16 %v835, %v834
    %v848 = vpack.c.bf16 %v837, %v836
    %v849 = vpack.c.bf16 %v839, %v838
    %v850 = vpack.c.bf16 %v841, %v840
    %v851 = vpack.c.bf16 %v843, %v842
    %v853 = vunpack.c.h.b16 %v502
    %v854 = vpack.c.b16 %v853, %v853
    %v856 = vsel %vm547, %v844, 0
    %v859 = vsel %vm547, %v845, 0
    %v862 = vsel %vm547, %v846, 0
    %v865 = vsel %vm547, %v847, 0
    %v868 = vsel %vm547, %v848, 0
    %v871 = vsel %vm547, %v849, 0
    %v874 = vsel %vm547, %v850, 0
    %v877 = vsel %vm547, %v851, 0
    %v880 = vsel %vm572, %v854, 0
    %882 = vmatpush.bf16.msra.mxu0 0
    %883 = vmatpush.bf16.msra.mxu0 0
    %884 = vmatpush.bf16.msra.mxu0 0
    %885 = vmatpush.bf16.msra.mxu0 0
    %886 = vmatpush.bf16.msra.mxu0 0
    %887 = vmatpush.bf16.msra.mxu0 0
    %888 = vmatpush.bf16.msra.mxu0 0
    %889 = vmatpush.bf16.msra.mxu0 %v880
    %890 = vmatmul.bf16.gmra.mxu0 %v856
    %v891 = vpop.f32.mrf.mxu0
    %v892 = vadd.f32 0.0, %v891
    %v893 = vpop.f32.mrf.mxu0
    %v894 = vadd.f32 0.0, %v893
    %895 = vmatmul.bf16.gmra.mxu0 %v859
    %v896 = vpop.f32.mrf.mxu0
    %v897 = vadd.f32 0.0, %v896
    %v898 = vpop.f32.mrf.mxu0
    %v899 = vadd.f32 0.0, %v898
    %900 = vmatmul.bf16.gmra.mxu0 %v862
    %v901 = vpop.f32.mrf.mxu0
    %v902 = vadd.f32 0.0, %v901
    %v903 = vpop.f32.mrf.mxu0
    %v904 = vadd.f32 0.0, %v903
    %905 = vmatmul.bf16.gmra.mxu0 %v865
    %v906 = vpop.f32.mrf.mxu0
    %v907 = vadd.f32 0.0, %v906
    %v908 = vpop.f32.mrf.mxu0
    %v909 = vadd.f32 0.0, %v908
    %910 = vmatmul.bf16.gmra.mxu0 %v868
    %v911 = vpop.f32.mrf.mxu0
    %v912 = vadd.f32 0.0, %v911
    %v913 = vpop.f32.mrf.mxu0
    %v914 = vadd.f32 0.0, %v913
    %915 = vmatmul.bf16.gmra.mxu0 %v871
    %v916 = vpop.f32.mrf.mxu0
    %v917 = vadd.f32 0.0, %v916
    %v918 = vpop.f32.mrf.mxu0
    %v919 = vadd.f32 0.0, %v918
    %920 = vmatmul.bf16.gmra.mxu0 %v874
    %v921 = vpop.f32.mrf.mxu0
    %v922 = vadd.f32 0.0, %v921
    %v923 = vpop.f32.mrf.mxu0
    %v924 = vadd.f32 0.0, %v923
    %925 = vmatmul.bf16.gmra.mxu0 %v877
    %v926 = vpop.f32.mrf.mxu0
    %v927 = vadd.f32 0.0, %v926
    %v928 = vpop.f32.mrf.mxu0
    %v929 = vadd.f32 0.0, %v928
    %930 = vdwg.mxu0
    %931 = vmax.xlane.f32.xlu0 %v892
    %v932 = vpop.xlane.xlu0 %931
    %933 = vmax.xlane.f32.xlu0 %v894
    %v934 = vpop.xlane.xlu0 %933
    %935 = vmax.xlane.f32.xlu0 %v897
    %v936 = vpop.xlane.xlu0 %935
    %937 = vmax.xlane.f32.xlu0 %v899
    %v938 = vpop.xlane.xlu0 %937
    %939 = vmax.xlane.f32.xlu0 %v902
    %v940 = vpop.xlane.xlu0 %939
    %941 = vmax.xlane.f32.xlu0 %v904
    %v942 = vpop.xlane.xlu0 %941
    %943 = vmax.xlane.f32.xlu0 %v907
    %v944 = vpop.xlane.xlu0 %943
    %945 = vmax.xlane.f32.xlu0 %v909
    %v946 = vpop.xlane.xlu0 %945
    %947 = vmax.xlane.f32.xlu0 %v912
    %v948 = vpop.xlane.xlu0 %947
    %949 = vmax.xlane.f32.xlu0 %v914
    %v950 = vpop.xlane.xlu0 %949
    %951 = vmax.xlane.f32.xlu0 %v917
    %v952 = vpop.xlane.xlu0 %951
    %953 = vmax.xlane.f32.xlu0 %v919
    %v954 = vpop.xlane.xlu0 %953
    %955 = vmax.xlane.f32.xlu0 %v922
    %v956 = vpop.xlane.xlu0 %955
    %957 = vmax.xlane.f32.xlu0 %v924
    %v958 = vpop.xlane.xlu0 %957
    %959 = vmax.xlane.f32.xlu0 %v927
    %v960 = vpop.xlane.xlu0 %959
    %961 = vmax.xlane.f32.xlu0 %v929
    %v962 = vpop.xlane.xlu0 %961
    %v963 = vsub.f32 %v892, %v932
    %v964 = vsub.f32 %v894, %v934
    %v965 = vsub.f32 %v897, %v936
    %v966 = vsub.f32 %v899, %v938
    %v967 = vsub.f32 %v902, %v940
    %v968 = vsub.f32 %v904, %v942
    %v969 = vsub.f32 %v907, %v944
    %v970 = vsub.f32 %v909, %v946
    %v971 = vsub.f32 %v912, %v948
    %v972 = vsub.f32 %v914, %v950
    %v973 = vsub.f32 %v917, %v952
    %v974 = vsub.f32 %v919, %v954
    %v975 = vsub.f32 %v922, %v956
    %v976 = vsub.f32 %v924, %v958
    %v977 = vsub.f32 %v927, %v960
    %v978 = vsub.f32 %v929, %v962
    %v979 = vmul.f32 %v963, 1.442695
    %v980 = vpow.pop %v979
    %v981 = vmul.f32 %v964, 1.442695
    %v982 = vpow.pop %v981
    %v983 = vmul.f32 %v965, 1.442695
    %v984 = vpow.pop %v983
    %v985 = vmul.f32 %v966, 1.442695
    %v986 = vpow.pop %v985
    %v987 = vmul.f32 %v967, 1.442695
    %v988 = vpow.pop %v987
    %v989 = vmul.f32 %v968, 1.442695
    %v990 = vpow.pop %v989
    %v991 = vmul.f32 %v969, 1.442695
    %v992 = vpow.pop %v991
    %v993 = vmul.f32 %v970, 1.442695
    %v994 = vpow.pop %v993
    %v995 = vmul.f32 %v971, 1.442695
    %v996 = vpow.pop %v995
    %v997 = vmul.f32 %v972, 1.442695
    %v998 = vpow.pop %v997
    %v999 = vmul.f32 %v973, 1.442695
    %v1000 = vpow.pop %v999
    %v1001 = vmul.f32 %v974, 1.442695
    %v1002 = vpow.pop %v1001
    %v1003 = vmul.f32 %v975, 1.442695
    %v1004 = vpow.pop %v1003
    %v1005 = vmul.f32 %v976, 1.442695
    %v1006 = vpow.pop %v1005
    %v1007 = vmul.f32 %v977, 1.442695
    %v1008 = vpow.pop %v1007
    %v1009 = vmul.f32 %v978, 1.442695
    %v1010 = vpow.pop %v1009
    %1011 = vadd.xlane.f32.xlu0 %v980
    %v1012 = vpop.xlane.xlu0 %1011
    %1013 = vadd.xlane.f32.xlu0 %v982
    %v1014 = vpop.xlane.xlu0 %1013
    %1015 = vadd.xlane.f32.xlu0 %v984
    %v1016 = vpop.xlane.xlu0 %1015
    %1017 = vadd.xlane.f32.xlu0 %v986
    %v1018 = vpop.xlane.xlu0 %1017
    %1019 = vadd.xlane.f32.xlu0 %v988
    %v1020 = vpop.xlane.xlu0 %1019
    %1021 = vadd.xlane.f32.xlu0 %v990
    %v1022 = vpop.xlane.xlu0 %1021
    %1023 = vadd.xlane.f32.xlu0 %v992
    %v1024 = vpop.xlane.xlu0 %1023
    %1025 = vadd.xlane.f32.xlu0 %v994
    %v1026 = vpop.xlane.xlu0 %1025
    %1027 = vadd.xlane.f32.xlu0 %v996
    %v1028 = vpop.xlane.xlu0 %1027
    %1029 = vadd.xlane.f32.xlu0 %v998
    %v1030 = vpop.xlane.xlu0 %1029
    %1031 = vadd.xlane.f32.xlu0 %v1000
    %v1032 = vpop.xlane.xlu0 %1031
    %1033 = vadd.xlane.f32.xlu0 %v1002
    %v1034 = vpop.xlane.xlu0 %1033
    %1035 = vadd.xlane.f32.xlu0 %v1004
    %v1036 = vpop.xlane.xlu0 %1035
    %1037 = vadd.xlane.f32.xlu0 %v1006
    %v1038 = vpop.xlane.xlu0 %1037
    %1039 = vadd.xlane.f32.xlu0 %v1008
    %v1040 = vpop.xlane.xlu0 %1039
    %1041 = vadd.xlane.f32.xlu0 %v1010
    %v1042 = vpop.xlane.xlu0 %1041
    %v1043 = vrcp.pop %v1012
    %v1044 = vrcp.pop %v1014
    %v1045 = vrcp.pop %v1016
    %v1046 = vrcp.pop %v1018
    %v1047 = vrcp.pop %v1020
    %v1048 = vrcp.pop %v1022
    %v1049 = vrcp.pop %v1024
    %v1050 = vrcp.pop %v1026
    %v1051 = vrcp.pop %v1028
    %v1052 = vrcp.pop %v1030
    %v1053 = vrcp.pop %v1032
    %v1054 = vrcp.pop %v1034
    %v1055 = vrcp.pop %v1036
    %v1056 = vrcp.pop %v1038
    %v1057 = vrcp.pop %v1040
    %v1058 = vrcp.pop %v1042
    %v1059 = vmul.f32 %v980, %v1043
    %v1060 = vmul.f32 %v982, %v1044
    %v1061 = vmul.f32 %v984, %v1045
    %v1062 = vmul.f32 %v986, %v1046
    %v1063 = vmul.f32 %v988, %v1047
    %v1064 = vmul.f32 %v990, %v1048
    %v1065 = vmul.f32 %v992, %v1049
    %v1066 = vmul.f32 %v994, %v1050
    %v1067 = vmul.f32 %v996, %v1051
    %v1068 = vmul.f32 %v998, %v1052
    %v1069 = vmul.f32 %v1000, %v1053
    %v1070 = vmul.f32 %v1002, %v1054
    %v1071 = vmul.f32 %v1004, %v1055
    %v1072 = vmul.f32 %v1006, %v1056
    %v1073 = vmul.f32 %v1008, %v1057
    %v1074 = vmul.f32 %v1010, %v1058
    %v1075 = vpack.c.bf16 %v1060, %v1059
    %v1076 = vpack.c.bf16 %v1062, %v1061
    %v1077 = vpack.c.bf16 %v1064, %v1063
    %v1078 = vpack.c.bf16 %v1066, %v1065
    %v1079 = vpack.c.bf16 %v1068, %v1067
    %v1080 = vpack.c.bf16 %v1070, %v1069
    %v1081 = vpack.c.bf16 %v1072, %v1071
    %v1082 = vpack.c.bf16 %v1074, %v1073
    %v1083 = vunpack.c.h.b16 %v503
    %v1084 = vunpack.c.h.b16 %v504
    %v1085 = vunpack.c.h.b16 %v505
    %v1086 = vunpack.c.h.b16 %v506
    %v1087 = vpack.c.b16 %v1084, %v1083
    %v1088 = vpack.c.b16 %v1086, %v1085
    %1091 = vmatpush.bf16.xpose.msra.mxu0 %v1082
    %1092 = vmatpush.bf16.xpose.msra.mxu0 %v1081
    %1093 = vmatpush.bf16.xpose.msra.mxu0 %v1080
    %1094 = vmatpush.bf16.xpose.msra.mxu0 %v1079
    %1095 = vmatpush.bf16.xpose.msra.mxu0 %v1078
    %1096 = vmatpush.bf16.xpose.msra.mxu0 %v1077
    %1097 = vmatpush.bf16.xpose.msra.mxu0 %v1076
    %1098 = vmatpush.bf16.xpose.msra.mxu0 %v1075
    %1099 = vmatmul.bf16.gmra.mxu0 %v1087
    %v1100 = vpop.f32.mrf.mxu0
    %v1101 = vadd.f32 %v377, %v1100
    %v1102 = vpop.f32.mrf.mxu0
    %v1103 = vadd.f32 %v379, %v1102
    %1104 = vmatmul.bf16.gmra.mxu0 %v1088
    %v1105 = vpop.f32.mrf.mxu0
    %v1106 = vadd.f32 %v381, %v1105
    %v1107 = vpop.f32.mrf.mxu0
    %v1108 = vadd.f32 %v383, %v1107
    %1109 = vdwg.mxu0
    %s1110 = scalar_lea.vmem [#allocation2], 32
    %1111 = vst [vmem:[%s1110] sm:$0xff] %v1101
    %1112 = vst [vmem:[%s1110 + $0x8] sm:$0xff] %v1103
    %1113 = vst [vmem:[%s1110 + $0x10] sm:$0xff] %v1106
    %1114 = vst [vmem:[%s1110 + $0x18] sm:$0xff] %v1108
    // Predicated region
    $region34: #{tpu_custom_call.1} parent=1 // pred_check
      _
    $region35: #{tpu_custom_call.1} parent=1 // pred_check_branch
      %1116 = sbr.rel (0) target = $region37
    $region36: #{tpu_custom_call.1} parent=1 // pred_region
      %1118 = vsyncadd [#allocation3], 0
      %s1119 = sshll.u32 [#allocation2], 4
      %s1120 = int_to_ptr.vmem [resolvable:$true] %s1119
      %s1121 = sshll.u32 %s8, 4
      %s1122 = int_to_ptr.hbm [resolvable:$true] %s1121
      %1127 = dma.vmem_to_hbm [thread:$0]  %s1120, 1024, %s1122, [#allocation3], 128, 128, 8
    $region37: #{tpu_custom_call.1} parent=1 // pred_fallthru
      _
    // Predicated region
    $region38: #{tpu_custom_call.1} parent=1 // pred_check
      _
    $region39: #{tpu_custom_call.1} parent=1 // pred_check_branch
      %1129 = sbr.rel (0) target = $region41
    $region40: #{tpu_custom_call.1} parent=1 // pred_region
      %1131 = dma.done [#allocation3], 1024
    $region41: #{tpu_custom_call.1} parent=1 // pred_fallthru
      _
    %1132 = vsyncpa [#allocation3], 1

</llo_original>
